<compile_context>
chip_gen: v7x
topology: tpu7x:2x2x1
jax: 0.10.0
libtpu: 0.0.40
codegen_flags: <defaults>
</compile_context>

<pallas_src>
import math

import jax
import jax.numpy as jnp
from jax.experimental import pallas as pl
from jax.experimental.pallas import tpu as pltpu


def _copy_kernel(x_ref, o_ref):
    # Identity copy of the current VMEM tile (unmasked, lane-dense vst).
    o_ref[...] = x_ref[...]


def _lane_dense_layout(total, itemsize):
    """Pick a (rows, lane) lane-dense 2-D view of `total` elements, or None.

    Prefers the widest lane that still leaves at least one full sublane tile
    of rows (8 for f32, 16 for bf16, 32 for int8/fp8).  Returns None if
    `total` is not a multiple of 128 (ragged -> caller bypasses the kernel).
    """
    sublane = max(8, 32 // itemsize)
    best = None
    for lane in (1024, 512, 256, 128):
        if total % lane == 0:
            rows = total // lane
            if best is None:
                best = (rows, lane)
            if rows >= sublane:
                return rows, lane
    return best  # widest legal (possibly skinny) layout, or None


def _identity_copy(x2d):
    """Tiled, lane-dense Pallas identity copy of a (rows, lane) slab."""
    rows, lane = x2d.shape
    itemsize = jnp.dtype(x2d.dtype).itemsize
    # Dtype-aware sublane alignment: 8 rows f32, 16 rows bf16, 32 rows int8.
    sublane = max(8, 32 // itemsize)

    # ~2 MiB per block: in+out, double-buffered => <= ~8 MiB VMEM footprint,
    # under the default scoped-VMEM limit on v5e (16 MiB) and v6e/v7x (32 MiB),
    # so no explicit vmem_limit_bytes is needed on any generation.
    target_elems = (2 << 20) // itemsize
    tile_rows = min(rows, max(sublane, target_elems // lane))
    tile_rows = (tile_rows // sublane) * sublane
    if tile_rows <= 0 or tile_rows >= rows:
        tile_rows = rows  # small case: single full-array block, grid=(1,)

    grid = (pl.cdiv(rows, tile_rows),)

    # TODO(synk): on v7x, pltpu.CORE_PARALLEL would shard this streaming copy
    #             across both TensorCores; "parallel" is kept for portability
    #             across v5e/v6e (single-TC) without runtime chip detection.
    return pl.pallas_call(
        _copy_kernel,
        out_shape=jax.ShapeDtypeStruct((rows, lane), x2d.dtype),
        grid=grid,
        in_specs=[pl.BlockSpec((tile_rows, lane), lambda i: (i, 0))],
        out_specs=pl.BlockSpec((tile_rows, lane), lambda i: (i, 0)),
        compiler_params=pltpu.CompilerParams(
            dimension_semantics=("parallel",),
        ),
        cost_estimate=pl.CostEstimate(
            flops=0,
            transcendentals=0,
            bytes_accessed=2 * rows * lane * itemsize,
        ),
    )(x2d)


def flatten_layer_forward(x, outdim, *, force_copy=False):
    """Pallas/JAX implementation of FlattenLayer.forward.

    output_shape = input_shape[:outdim-1] + (prod(input_shape[outdim-1:]),)
    forward(x)   = x.view(x.shape[0], *output_shape[1:])

    Default path is a free metadata reshape (no kernel, no HBM traffic).
    `force_copy=True` materializes a fresh buffer via the Pallas copy kernel
    when a lane-dense layout exists; otherwise it falls back to the reshape.
    """
    # TODO(synk): the reference module uses torch.DoubleTensor (float64); TPU
    #             Pallas has no f64 compute path, so the input dtype is kept.
    input_shape = tuple(int(s) for s in x.shape)
    to_flatten = input_shape[outdim - 1:]
    output_shape = input_shape[:outdim - 1] + (int(math.prod(to_flatten)),)
    # Torch forward uses the runtime batch dim for axis 0.
    out_args = (input_shape[0],) + tuple(int(s) for s in output_shape[1:])

    total = math.prod(input_shape)
    assert total == math.prod(out_args), (
        f"cannot view {input_shape} as {out_args}"
    )

    if force_copy:
        itemsize = jnp.dtype(x.dtype).itemsize
        layout = _lane_dense_layout(total, itemsize)
        if layout is not None:
            rows, lane = layout
            out2d = _identity_copy(x.reshape((rows, lane)))
            return out2d.reshape(out_args)
        # Ragged element count: no lane-dense layout without pad/slice glue
        # (which would double HBM traffic), so use the free reshape instead.

    # Pure metadata reshape -- exactly what torch .view() does.
    return x.reshape(out_args)


if __name__ == "__main__":
    key = jax.random.PRNGKey(0)
    # NCHW-style input, small shapes: batch=2, channels=4, spatial=16x16.
    x = jax.random.normal(key, (2, 4, 16, 16), dtype=jnp.float32)
    outdim = 2
    y_ref = x.reshape((2, 4 * 16 * 16))

    # Default path: zero-cost metadata reshape (no kernel launched).
    y = jax.block_until_ready(flatten_layer_forward(x, outdim))
    assert y.shape == (2, 1024)
    assert y.dtype == x.dtype
    assert bool(jnp.array_equal(y, y_ref))

    # Forced-materialization path: runs the Pallas identity-copy kernel.
    y_copy = jax.block_until_ready(
        flatten_layer_forward(x, outdim, force_copy=True))
    assert y_copy.shape == (2, 1024)
    assert bool(jnp.array_equal(y_copy, y_ref))

    # bf16 input exercises the 16-row sublane alignment in the kernel path.
    x_bf16 = jax.random.normal(key, (2, 8, 16, 16), dtype=jnp.bfloat16)
    y_bf16 = jax.block_until_ready(
        flatten_layer_forward(x_bf16, outdim, force_copy=True))
    assert bool(jnp.array_equal(y_bf16, x_bf16.reshape((2, 8 * 16 * 16))))

    # Ragged element count (105): no lane-dense layout -> free reshape fallback
    # (the old pad/slice path is gone, so this must still be exact).
    x2 = jax.random.normal(key, (3, 5, 7), dtype=jnp.float32)
    y2 = jax.block_until_ready(flatten_layer_forward(x2, 2, force_copy=True))
    assert bool(jnp.array_equal(y2, x2.reshape((3, 35))))

    print("KERNEL_OK")
</pallas_src>

<mosaic_0001>
module attributes {stable_mosaic.version = 11 : i64} {
  func.func @_copy_kernel(%arg0: i32, %arg1: memref<8x256xf32, #tpu.memory_space<vmem>>, %arg2: memref<8x256xf32, #tpu.memory_space<vmem>>) attributes {dimension_semantics = [#tpu.dimension_semantics<parallel>], iteration_bounds = array<i64: 1>, scalar_prefetch = 0 : i64, scratch_operands = 0 : i64, tpu.core_type = #tpu.core_type<tc>, window_params = [{transform_indices = @transform_0, window_bounds = array<i64: 8, 256>}, {transform_indices = @transform_1, window_bounds = array<i64: 8, 256>}]} {
    %c0 = arith.constant 0 : index
    %c0_0 = arith.constant 0 : index
    %0 = vector.load %arg1[%c0, %c0_0] : memref<8x256xf32, #tpu.memory_space<vmem>>, vector<8x256xf32>
    %c0_1 = arith.constant 0 : index
    %c0_2 = arith.constant 0 : index
    %1 = vector.load %arg2[%c0_1, %c0_2] : memref<8x256xf32, #tpu.memory_space<vmem>>, vector<8x256xf32>
    tpu.vector_store %arg2[%c0_1, %c0_2], %0 {strides = array<i32>} : memref<8x256xf32, #tpu.memory_space<vmem>>, vector<8x256xf32>,
    return
  }
  func.func @transform_0(%arg0: i32) -> (i32, i32) {
    %c0_i32 = arith.constant 0 : i32
    %c0_i32_0 = arith.constant 0 : i32
    return %arg0, %c0_i32 : i32, i32
  }
  func.func @transform_1(%arg0: i32) -> (i32, i32) {
    %c0_i32 = arith.constant 0 : i32
    %c0_i32_0 = arith.constant 0 : i32
    return %arg0, %c0_i32 : i32, i32
  }
}

</mosaic_0001>

<llo_original>
// kernel: tpu_custom_call.1
$region0: #{tpu_custom_call.1}
  #allocation0 [shape = 'u32[]', space=smem, size = 0x4, offset = 0x4, fixed_abs, tag = 'smem constant byte address 0x4 - core index']
  #allocation1 [shape = 'u32[144,128]{1,0:T(1,128)}', space=vmem, size = 0x12000, scoped, tag = 'internal scratch']
  %s0 = inlined_call_operand.hbm [shape: f32[8,256], index: 0, kind: input, shape index: {}]
  %s1 = inlined_call_operand.hbm [shape: f32[8,256], index: 1, kind: output, shape index: {}]
  %s2 = sld [smem:[#allocation0]]
  $region18: #{tpu_custom_call.1} parent=0
    _
  %s4 = ssub.s32 1, %s2
  %s5 = scalar_select 0, %s4, %s2
  $region1: #{tpu_custom_call.1} parent=0
    #allocation2 [shape = 'u8[8192]{0}', space=vmem, size = 0x2000, scoped, tag = 'input window, operand 0, single buffered']
    #allocation3 [shape = 's32[1]{0}', space=sflag, size = 0x4, scoped, tag = 'scoped memory for tpu_custom_call.1']
    #allocation4 [shape = 's32[1]{0}', space=sflag, size = 0x4, scoped, tag = 'scoped memory for tpu_custom_call.1']
    #allocation5 [shape = 'u8[8192]{0}', space=vmem, size = 0x2000, scoped, tag = 'output window, operand 0, single buffered']
    %6 = vsyncpa [#allocation3], 0
    %7 = vsyncpa [#allocation4], 0
    // Predicated region
    $region2: #{tpu_custom_call.1} parent=1 // pred_check
      _
    $region3: #{tpu_custom_call.1} parent=1 // pred_check_branch
      %9 = sbr.rel (0) target = $region5
    $region4: #{tpu_custom_call.1} parent=1 // pred_region
      %s11 = ssub.s32 256, 256
      %12 = vsyncadd [#allocation3], %s11
      %s14 = sshll.u32 [#allocation2], 4
      %s15 = int_to_ptr.vmem [resolvable:$true] %s14
      %17 = dma.hbm_to_vmem [thread:$0]  %s0, 256, %s15, [#allocation3]
    $region5: #{tpu_custom_call.1} parent=1 // pred_fallthru
      _
    // Predicated region
    $region6: #{tpu_custom_call.1} parent=1 // pred_check
      _
    $region7: #{tpu_custom_call.1} parent=1 // pred_check_branch
      %19 = sbr.rel (0) target = $region9
    $region8: #{tpu_custom_call.1} parent=1 // pred_region
      %20 = dma.done [#allocation3], 256
    $region9: #{tpu_custom_call.1} parent=1 // pred_fallthru
      _
    %v21 = vld [vmem:[#allocation2] sm:$0xff]
    %v22 = vld [vmem:[#allocation2 + $0x8] sm:$0xff]
    %23 = vst [vmem:[#allocation5] sm:$0xff] %v21
    %24 = vst [vmem:[#allocation5 + $0x8] sm:$0xff] %v22
    // Predicated region
    $region10: #{tpu_custom_call.1} parent=1 // pred_check
      _
    $region11: #{tpu_custom_call.1} parent=1 // pred_check_branch
      %26 = sbr.rel (0) target = $region13
    $region12: #{tpu_custom_call.1} parent=1 // pred_region
      %s28 = ssub.s32 256, 256
      %29 = vsyncadd [#allocation4], %s28
      %s31 = sshll.u32 [#allocation5], 4
      %s32 = int_to_ptr.vmem [resolvable:$true] %s31
      %34 = dma.vmem_to_hbm [thread:$0]  %s32, 256, %s1, [#allocation4]
    $region13: #{tpu_custom_call.1} parent=1 // pred_fallthru
      _
    // Predicated region
    $region14: #{tpu_custom_call.1} parent=1 // pred_check
      _
    $region15: #{tpu_custom_call.1} parent=1 // pred_check_branch
      %36 = sbr.rel (0) target = $region17
    $region16: #{tpu_custom_call.1} parent=1 // pred_region
      %37 = dma.done [#allocation4], 256
    $region17: #{tpu_custom_call.1} parent=1 // pred_fallthru
      _
    %38 = vsyncpa [#allocation3], 1
    %39 = vsyncpa [#allocation4], 1

</llo_original>
